<compile_context>
chip_gen: v7x
topology: tpu7x:2x2x1
jax: 0.10.0
libtpu: 0.0.40
codegen_flags: <defaults>
</compile_context>

<pallas_src>
import jax
import jax.numpy as jnp
from jax.experimental import pallas as pl
from jax.experimental.pallas import tpu as pltpu


_LANE = 128            # TPU vreg lane width
_MAX_LANE_TILE = 32768  # 0.5 MiB f32 per (4, tile) input slab — safe on all generations


def _round_up(x, m):
    return ((x + m - 1) // m) * m


def _model_kernel(x0_ref, x2_ref, out_ref):
    """2x2 matmul chain + double tanh, batch mapped to the 128-lane axis.

    Refs are (4, BT) f32 slabs: row r holds flattened matrix element (i, j) with
    r = 2*i + j; columns are batch elements (BT % 128 == 0 -> unmasked lane ops).
    Computes tanh(tanh((x2 @ x0 @ x2)^T)) == tanh(tanh(x2^T @ x0^T @ x2^T)); the
    transpose is folded into which output row receives which element (zero cost).
    """
    a = x0_ref[...]                       # (4, BT)
    b = x2_ref[...]                       # (4, BT)
    a00, a01, a10, a11 = a[0:1], a[1:2], a[2:3], a[3:4]
    b00, b01, b10, b11 = b[0:1], b[1:2], b[2:3], b[3:4]

    # m1 = x2 @ x0   (untransposed operands, per batch lane, pure VPU FMAs)
    m1_00 = b00 * a00 + b01 * a10
    m1_01 = b00 * a01 + b01 * a11
    m1_10 = b10 * a00 + b11 * a10
    m1_11 = b10 * a01 + b11 * a11

    # m2 = m1 @ x2
    m2_00 = m1_00 * b00 + m1_01 * b10
    m2_01 = m1_00 * b01 + m1_01 * b11
    m2_10 = m1_10 * b00 + m1_11 * b10
    m2_11 = m1_10 * b01 + m1_11 * b11

    # Transposed write-out: output element (i, j) <- m2[j][i]; tanh on the EUP.
    out_ref[0:1, :] = jnp.tanh(jnp.tanh(m2_00))   # output (0, 0)
    out_ref[1:2, :] = jnp.tanh(jnp.tanh(m2_10))   # output (0, 1)
    out_ref[2:3, :] = jnp.tanh(jnp.tanh(m2_01))   # output (1, 0)
    out_ref[3:4, :] = jnp.tanh(jnp.tanh(m2_11))   # output (1, 1)


@jax.jit
def model_forward(x0, x2):
    """Forward of the PyTorch Model: tanh(tanh(x2^T @ x0^T @ x2^T)); x0, x2: (B, 2, 2)."""
    B, M, K = x0.shape
    assert x2.shape == (B, M, K) and (M, K) == (2, 2)
    x0 = x0.astype(jnp.float32)
    x2 = x2.astype(jnp.float32)

    # Tile choice: pad batch to a multiple of 128 lanes; use big lane-dense tiles and
    # aim for >= 2 grid steps when possible so v7x megacore shards the batch axis.
    B_lanes = _round_up(B, _LANE)
    if B_lanes > _LANE:
        bt = min(_MAX_LANE_TILE, _round_up(B_lanes // 2, _LANE))
    else:
        bt = _LANE
    Bp = _round_up(B_lanes, bt)
    grid = Bp // bt

    # Lane-dense re-layout (layout plumbing only; compute stays in the kernel):
    # (B, 2, 2) -> (4, Bp), element index on sublanes, batch on lanes, zero-padded lanes.
    def to_slab(x):
        s = jnp.transpose(x.reshape(B, 4))            # (4, B)
        return jnp.pad(s, ((0, 0), (0, Bp - B)))      # (4, Bp)

    a = to_slab(x0)
    b = to_slab(x2)

    out_slab = pl.pallas_call(
        _model_kernel,
        out_shape=jax.ShapeDtypeStruct((4, Bp), jnp.float32),
        grid=(grid,),
        in_specs=[
            pl.BlockSpec((4, bt), lambda g: (0, g)),
            pl.BlockSpec((4, bt), lambda g: (0, g)),
        ],
        out_specs=pl.BlockSpec((4, bt), lambda g: (0, g)),
        compiler_params=pltpu.CompilerParams(
            dimension_semantics=("parallel",)),
    )(a, b)

    # Back to the module's (B, 2, 2) layout. The mathematical transpose was already
    # folded into the kernel's writes; this is only the inverse of the layout plumbing.
    return jnp.transpose(out_slab[:, :B]).reshape(B, 2, 2)


@jax.jit
def _reference(x0, x2):
    v0 = jnp.swapaxes(x0, 1, 2)
    v3 = jnp.swapaxes(x2, 1, 2)
    v3_1 = jnp.matmul(v3, v0)
    v11 = jnp.matmul(v3_1, v3)
    return jnp.tanh(jnp.tanh(v11))


if __name__ == "__main__":
    key = jax.random.PRNGKey(0)
    k0, k2, k3, k4 = jax.random.split(key, 4)

    # Same shapes as the PyTorch script: (1, 2, 2).
    x0 = jax.random.normal(k0, (1, 2, 2), dtype=jnp.float32)
    x2 = jax.random.normal(k2, (1, 2, 2), dtype=jnp.float32)
    out = model_forward(x0, x2)
    jax.block_until_ready(out)
    assert out.shape == (1, 2, 2)
    assert jnp.allclose(out, _reference(x0, x2), atol=1e-5, rtol=1e-5)

    # Larger batch exercises the lane-dense multi-step grid path (padding + 2 tiles).
    y0 = jax.random.normal(k3, (300, 2, 2), dtype=jnp.float32)
    y2 = jax.random.normal(k4, (300, 2, 2), dtype=jnp.float32)
    out_big = model_forward(y0, y2)
    jax.block_until_ready(out_big)
    assert out_big.shape == (300, 2, 2)
    assert jnp.allclose(out_big, _reference(y0, y2), atol=1e-5, rtol=1e-5)

    print("KERNEL_OK")
</pallas_src>

<mosaic_0001>
module attributes {stable_mosaic.version = 11 : i64} {
  func.func @_model_kernel(%arg0: i32, %arg1: memref<4x128xf32, #tpu.memory_space<vmem>>, %arg2: memref<4x128xf32, #tpu.memory_space<vmem>>, %arg3: memref<4x128xf32, #tpu.memory_space<vmem>>) attributes {dimension_semantics = [#tpu.dimension_semantics<parallel>], iteration_bounds = array<i64: 1>, scalar_prefetch = 0 : i64, scratch_operands = 0 : i64, tpu.core_type = #tpu.core_type<tc>, window_params = [{transform_indices = @transform_0, window_bounds = array<i64: 4, 128>}, {transform_indices = @transform_1, window_bounds = array<i64: 4, 128>}, {transform_indices = @transform_2, window_bounds = array<i64: 4, 128>}]} {
    %c0 = arith.constant 0 : index
    %c0_0 = arith.constant 0 : index
    %0 = vector.load %arg1[%c0, %c0_0] : memref<4x128xf32, #tpu.memory_space<vmem>>, vector<4x128xf32>
    %c0_1 = arith.constant 0 : index
    %c0_2 = arith.constant 0 : index
    %1 = vector.load %arg2[%c0_1, %c0_2] : memref<4x128xf32, #tpu.memory_space<vmem>>, vector<4x128xf32>
    %2 = vector.extract_strided_slice %0 {offsets = [0, 0], sizes = [1, 128], strides = [1, 1]} : vector<4x128xf32> to vector<1x128xf32>
    %3 = vector.extract_strided_slice %0 {offsets = [1, 0], sizes = [1, 128], strides = [1, 1]} : vector<4x128xf32> to vector<1x128xf32>
    %4 = vector.extract_strided_slice %0 {offsets = [2, 0], sizes = [1, 128], strides = [1, 1]} : vector<4x128xf32> to vector<1x128xf32>
    %5 = vector.extract_strided_slice %0 {offsets = [3, 0], sizes = [1, 128], strides = [1, 1]} : vector<4x128xf32> to vector<1x128xf32>
    %6 = vector.extract_strided_slice %1 {offsets = [0, 0], sizes = [1, 128], strides = [1, 1]} : vector<4x128xf32> to vector<1x128xf32>
    %7 = vector.extract_strided_slice %1 {offsets = [1, 0], sizes = [1, 128], strides = [1, 1]} : vector<4x128xf32> to vector<1x128xf32>
    %8 = vector.extract_strided_slice %1 {offsets = [2, 0], sizes = [1, 128], strides = [1, 1]} : vector<4x128xf32> to vector<1x128xf32>
    %9 = vector.extract_strided_slice %1 {offsets = [3, 0], sizes = [1, 128], strides = [1, 1]} : vector<4x128xf32> to vector<1x128xf32>
    %10 = arith.mulf %6, %2 : vector<1x128xf32>
    %11 = arith.mulf %7, %4 : vector<1x128xf32>
    %12 = arith.addf %10, %11 : vector<1x128xf32>
    %13 = arith.mulf %6, %3 : vector<1x128xf32>
    %14 = arith.mulf %7, %5 : vector<1x128xf32>
    %15 = arith.addf %13, %14 : vector<1x128xf32>
    %16 = arith.mulf %8, %2 : vector<1x128xf32>
    %17 = arith.mulf %9, %4 : vector<1x128xf32>
    %18 = arith.addf %16, %17 : vector<1x128xf32>
    %19 = arith.mulf %8, %3 : vector<1x128xf32>
    %20 = arith.mulf %9, %5 : vector<1x128xf32>
    %21 = arith.addf %19, %20 : vector<1x128xf32>
    %22 = arith.mulf %12, %6 : vector<1x128xf32>
    %23 = arith.mulf %15, %8 : vector<1x128xf32>
    %24 = arith.addf %22, %23 : vector<1x128xf32>
    %25 = arith.mulf %12, %7 : vector<1x128xf32>
    %26 = arith.mulf %15, %9 : vector<1x128xf32>
    %27 = arith.addf %25, %26 : vector<1x128xf32>
    %28 = arith.mulf %18, %6 : vector<1x128xf32>
    %29 = arith.mulf %21, %8 : vector<1x128xf32>
    %30 = arith.addf %28, %29 : vector<1x128xf32>
    %31 = arith.mulf %18, %7 : vector<1x128xf32>
    %32 = arith.mulf %21, %9 : vector<1x128xf32>
    %33 = arith.addf %31, %32 : vector<1x128xf32>
    %34 = math.tanh %24 : vector<1x128xf32>
    %35 = math.tanh %34 : vector<1x128xf32>
    %c0_3 = arith.constant 0 : index
    %c0_4 = arith.constant 0 : index
    %36 = vector.load %arg3[%c0_3, %c0_4] : memref<4x128xf32, #tpu.memory_space<vmem>>, vector<1x128xf32>
    tpu.vector_store %arg3[%c0_3, %c0_4], %35 {strides = array<i32>} : memref<4x128xf32, #tpu.memory_space<vmem>>, vector<1x128xf32>,
    %37 = math.tanh %30 : vector<1x128xf32>
    %38 = math.tanh %37 : vector<1x128xf32>
    %c1 = arith.constant 1 : index
    %c0_5 = arith.constant 0 : index
    %39 = vector.load %arg3[%c1, %c0_5] : memref<4x128xf32, #tpu.memory_space<vmem>>, vector<1x128xf32>
    tpu.vector_store %arg3[%c1, %c0_5], %38 {strides = array<i32>} : memref<4x128xf32, #tpu.memory_space<vmem>>, vector<1x128xf32>,
    %40 = math.tanh %27 : vector<1x128xf32>
    %41 = math.tanh %40 : vector<1x128xf32>
    %c2 = arith.constant 2 : index
    %c0_6 = arith.constant 0 : index
    %42 = vector.load %arg3[%c2, %c0_6] : memref<4x128xf32, #tpu.memory_space<vmem>>, vector<1x128xf32>
    tpu.vector_store %arg3[%c2, %c0_6], %41 {strides = array<i32>} : memref<4x128xf32, #tpu.memory_space<vmem>>, vector<1x128xf32>,
    %43 = math.tanh %33 : vector<1x128xf32>
    %44 = math.tanh %43 : vector<1x128xf32>
    %c3 = arith.constant 3 : index
    %c0_7 = arith.constant 0 : index
    %45 = vector.load %arg3[%c3, %c0_7] : memref<4x128xf32, #tpu.memory_space<vmem>>, vector<1x128xf32>
    tpu.vector_store %arg3[%c3, %c0_7], %44 {strides = array<i32>} : memref<4x128xf32, #tpu.memory_space<vmem>>, vector<1x128xf32>,
    return
  }
  func.func @transform_0(%arg0: i32) -> (i32, i32) {
    %c0_i32 = arith.constant 0 : i32
    %c0_i32_0 = arith.constant 0 : i32
    return %c0_i32, %arg0 : i32, i32
  }
  func.func @transform_1(%arg0: i32) -> (i32, i32) {
    %c0_i32 = arith.constant 0 : i32
    %c0_i32_0 = arith.constant 0 : i32
    return %c0_i32, %arg0 : i32, i32
  }
  func.func @transform_2(%arg0: i32) -> (i32, i32) {
    %c0_i32 = arith.constant 0 : i32
    %c0_i32_0 = arith.constant 0 : i32
    return %c0_i32, %arg0 : i32, i32
  }
}

</mosaic_0001>

<llo_original>
// kernel: model_forward.1
$region0: #{model_forward.1}
  #allocation0 [shape = 'u32[]', space=smem, size = 0x4, offset = 0x4, fixed_abs, tag = 'smem constant byte address 0x4 - core index']
  #allocation1 [shape = 'u32[144,128]{1,0:T(1,128)}', space=vmem, size = 0x12000, scoped, tag = 'internal scratch']
  %s0 = inlined_call_operand.vmem [shape: f32[4,128], index: 0, kind: input, shape index: {}]
  %s1 = inlined_call_operand.vmem [shape: f32[4,128], index: 1, kind: input, shape index: {}]
  %s2 = inlined_call_operand.vmem [shape: f32[4,128], index: 2, kind: output, shape index: {}]
  %s3 = sld [smem:[#allocation0]]
  $region18: #{model_forward.1} parent=0
    _
  %s5 = ssub.s32 1, %s3
  %s6 = scalar_select 0, %s5, %s3
  // Predicated region
  $region2: #{model_forward.1} parent=0 // pred_check
    _
  $region3: #{model_forward.1} parent=0 // pred_check_branch
    %8 = sbr.rel (0) target = $region5
  $region4: #{model_forward.1} parent=0 // pred_region
    _
  $region5: #{model_forward.1} parent=0 // pred_fallthru
    _
  // Predicated region
  $region6: #{model_forward.1} parent=0 // pred_check
    _
  $region7: #{model_forward.1} parent=0 // pred_check_branch
    %10 = sbr.rel (0) target = $region9
  $region8: #{model_forward.1} parent=0 // pred_region
    _
  $region9: #{model_forward.1} parent=0 // pred_fallthru
    _
  %v11 = vld [vmem:[%s0] sm:$0xf]
  %v12 = vld [vmem:[%s1] sm:$0xf]
  %v13 = vmul.f32 %v12, %v11
  %v15 = vrot.slane %v11, 1
  %v17 = vmul.f32 %v12, %v15
  %v19 = vrot.slane %v17, 1
  %v21 = vadd.f32 %v13, %v19
  %v22 = vrot.slane %v11, 2
  %v24 = vmul.f32 %v12, %v22
  %v26 = vrot.slane %v24, 1
  %v28 = vadd.f32 %v17, %v26
  %v29 = vrot.slane %v11, 6
  %v31 = vmul.f32 %v12, %v29
  %v32 = vrot.slane %v11, 7
  %v34 = vmul.f32 %v12, %v32
  %v36 = vrot.slane %v34, 1
  %v38 = vadd.f32 %v31, %v36
  %v40 = vrot.slane %v13, 1
  %v42 = vadd.f32 %v34, %v40
  %v43 = vmul.f32 %v21, %v12
  %v45 = vrot.slane %v12, 2
  %v47 = vmul.f32 %v28, %v45
  %v48 = vadd.f32 %v43, %v47
  %v49 = vrot.slane %v12, 1
  %v51 = vmul.f32 %v21, %v49
  %v52 = vrot.slane %v12, 3
  %v54 = vmul.f32 %v28, %v52
  %v55 = vadd.f32 %v51, %v54
  %v56 = vrot.slane %v12, 6
  %v58 = vmul.f32 %v38, %v56
  %v59 = vmul.f32 %v42, %v12
  %v60 = vadd.f32 %v58, %v59
  %v61 = vrot.slane %v12, 7
  %v63 = vmul.f32 %v38, %v61
  %v64 = vmul.f32 %v42, %v49
  %v65 = vadd.f32 %v63, %v64
  %v66 = vtanh.pop %v48
  %v67 = vtanh.pop %v66
  %68 = vst [vmem:[%s2] sm:$0x1] %v67
  %v69 = vtanh.pop %v60
  %v70 = vtanh.pop %v69
  %71 = vst [vmem:[%s2 - $0x1] sm:$0x4] %v70
  %v72 = vtanh.pop %v55
  %v73 = vtanh.pop %v72
  %74 = vst [vmem:[%s2 + $0x2] sm:$0x1] %v73
  %v75 = vtanh.pop %v65
  %v76 = vtanh.pop %v75
  %77 = vst [vmem:[%s2 + $0x1] sm:$0x4] %v76
  // Predicated region
  $region10: #{model_forward.1} parent=0 // pred_check
    _
  $region11: #{model_forward.1} parent=0 // pred_check_branch
    %79 = sbr.rel (0) target = $region13
  $region12: #{model_forward.1} parent=0 // pred_region
    _
  $region13: #{model_forward.1} parent=0 // pred_fallthru
    _
  // Predicated region
  $region14: #{model_forward.1} parent=0 // pred_check
    _
  $region15: #{model_forward.1} parent=0 // pred_check_branch
    %81 = sbr.rel (0) target = $region17
  $region16: #{model_forward.1} parent=0 // pred_region
    _
  $region17: #{model_forward.1} parent=0 // pred_fallthru
    _

</llo_original>
